<compile_context>
chip_gen: v7x
topology: tpu7x:2x2x1
jax: 0.10.0
libtpu: 0.0.40
codegen_flags: <defaults>
</compile_context>

<pallas_src>
import jax
import jax.numpy as jnp
from jax.experimental import pallas as pl
from jax.experimental.pallas import tpu as pltpu


def conv_bn_silu_kernel(x_ref, w_ref, bias_ref, o_ref, acc_ref):
    ci = pl.program_id(3)

    @pl.when(ci == 0)
    def _():
        acc_ref[...] = jnp.zeros_like(acc_ref)

    # (tile_co, tile_ci) @ (tile_ci, tile_hw) on the MXU, f32 accumulation.
    acc_ref[...] += jnp.dot(w_ref[...], x_ref[...],
                            preferred_element_type=jnp.float32)

    @pl.when(ci == pl.num_programs(3) - 1)
    def _():
        # BN scale is already folded into the weight; only the bias add remains.
        y = acc_ref[...] + bias_ref[...]                 # (tile_co, tile_hw) + (tile_co, 1)
        o_ref[...] = (y * jax.nn.sigmoid(y)).astype(o_ref.dtype)   # SiLU


def _channel_tile(c, pref=256):
    """Legal channel tile: full dim, or a 128-multiple divisor <= pref."""
    if c <= pref:
        return c
    for t in (pref, 128):
        if c % t == 0:
            return t
    return c  # fall back to resident full slab


def _spatial_tile(hw, pref=512):
    """Largest 128-multiple divisor of hw that is <= pref (else full hw)."""
    if hw % 128 != 0:
        # TODO(synk): pad H*W to a multiple of 128 for odd spatial sizes that
        # are too large to keep as one resident block.
        return hw
    t = min(pref, hw)
    t -= t % 128
    while t >= 128:
        if hw % t == 0:
            return t
        t -= 128
    return hw


def conv_bn_silu(x_nchw, weight, gamma, beta, running_mean, running_var, eps=1e-5):
    """x_nchw: (N, C_in, H, W); weight: (C_out, C_in, 1, 1). Inference-mode BN."""
    N, C_in, H, W = x_nchw.shape
    C_out = weight.shape[0]
    HW = H * W

    # Fold BN into the weight (per-out-channel scale) and a bias, all in f32
    # before any dtype cast of the operands.
    scale = gamma / jnp.sqrt(running_var.astype(jnp.float32) + eps)       # (C_out,)
    bias = (beta - running_mean * scale).astype(jnp.float32)              # (C_out,)
    w2d = (weight.reshape(C_out, C_in).astype(jnp.float32)
           * scale[:, None]).astype(x_nchw.dtype)                         # (C_out, C_in)
    bias2d = bias.reshape(C_out, 1)

    # Free reshape only — no NCHW<->NHWC transpose passes over HBM.
    x3d = x_nchw.reshape(N, C_in, HW)

    tile_ci = _channel_tile(C_in)
    tile_co = _channel_tile(C_out)
    tile_hw = _spatial_tile(HW)
    n_ci = C_in // tile_ci
    n_co = C_out // tile_co
    n_hw = HW // tile_hw

    # Explicit VMEM budget (v7x has only 64 MiB physical): double-buffered
    # x/out/w tiles + f32 accumulator, with 2x headroom, clamped to <= 48 MiB.
    itemsize = jnp.dtype(x_nchw.dtype).itemsize
    est_vmem = (2 * (tile_ci * tile_hw + tile_co * tile_hw + tile_co * tile_ci) * itemsize
                + tile_co * tile_hw * 4      # f32 accumulator scratch
                + 2 * tile_co * 4)           # bias
    vmem_limit = int(min(max(2 * est_vmem, 16 << 20), 48 << 20))

    out3d = pl.pallas_call(
        conv_bn_silu_kernel,
        out_shape=jax.ShapeDtypeStruct((N, C_out, HW), x_nchw.dtype),
        grid_spec=pltpu.PrefetchScalarGridSpec(
            num_scalar_prefetch=0,
            grid=(N, n_hw, n_co, n_ci),                    # reduction (C_in) last
            in_specs=[
                pl.BlockSpec((None, tile_ci, tile_hw),
                             lambda n, j, co, ci: (n, ci, j)),      # x slab
                pl.BlockSpec((tile_co, tile_ci),
                             lambda n, j, co, ci: (co, ci)),        # scaled weight
                pl.BlockSpec((tile_co, 1),
                             lambda n, j, co, ci: (co, 0)),         # BN bias
            ],
            out_specs=pl.BlockSpec((None, tile_co, tile_hw),
                                   lambda n, j, co, ci: (n, co, j)),
            scratch_shapes=[pltpu.VMEM((tile_co, tile_hw), jnp.float32)],
        ),
        compiler_params=pltpu.CompilerParams(
            dimension_semantics=("parallel", "parallel", "parallel", "arbitrary"),
            vmem_limit_bytes=vmem_limit,
        ),
    )(x3d, w2d, bias2d)

    # (N, C_out, H*W) -> (N, C_out, H, W): free reshape.
    return out3d.reshape(N, C_out, H, W)


if __name__ == "__main__":
    key = jax.random.PRNGKey(0)
    k_x, k_w, k_g, k_b, k_m, k_v = jax.random.split(key, 6)

    # Small shapes consistent with Conv(in_channels=4, out_channels=8, k=1)
    N, C_in, C_out, H, W = 2, 4, 8, 16, 16

    x = jax.random.normal(k_x, (N, C_in, H, W), jnp.float32)
    weight = jax.random.normal(k_w, (C_out, C_in, 1, 1), jnp.float32) * 0.1
    gamma = 1.0 + 0.1 * jax.random.normal(k_g, (C_out,), jnp.float32)
    beta = 0.1 * jax.random.normal(k_b, (C_out,), jnp.float32)
    running_mean = 0.1 * jax.random.normal(k_m, (C_out,), jnp.float32)
    running_var = jnp.abs(jax.random.normal(k_v, (C_out,), jnp.float32)) + 0.5

    out = conv_bn_silu(x, weight, gamma, beta, running_mean, running_var)
    jax.block_until_ready(out)

    # Pure-JAX reference: 1x1 conv (einsum) + BN (inference) + SiLU
    ref = jnp.einsum("nchw,oc->nohw", x, weight.reshape(C_out, C_in))
    scale = gamma / jnp.sqrt(running_var + 1e-5)
    bias = beta - running_mean * scale
    ref = ref * scale[None, :, None, None] + bias[None, :, None, None]
    ref = ref * jax.nn.sigmoid(ref)
    assert jnp.allclose(out, ref, atol=1e-5, rtol=1e-5), "mismatch vs reference"

    print("KERNEL_OK")
</pallas_src>

<mosaic_0001>
module attributes {stable_mosaic.version = 11 : i64} {
  func.func @conv_bn_silu_kernel(%arg0: i32, %arg1: i32, %arg2: i32, %arg3: i32, %arg4: memref<1x4x256xf32, #tpu.memory_space<vmem>>, %arg5: memref<8x4xf32, #tpu.memory_space<vmem>>, %arg6: memref<8x1xf32, #tpu.memory_space<vmem>>, %arg7: memref<1x8x256xf32, #tpu.memory_space<vmem>>, %arg8: memref<8x256xf32, #tpu.memory_space<vmem>>) attributes {dimension_semantics = [#tpu.dimension_semantics<parallel>, #tpu.dimension_semantics<parallel>, #tpu.dimension_semantics<parallel>, #tpu.dimension_semantics<arbitrary>], iteration_bounds = array<i64: 2, 1, 1, 1>, scalar_prefetch = 0 : i64, scratch_operands = 1 : i64, tpu.core_type = #tpu.core_type<tc>, window_params = [{transform_indices = @transform_0, window_bounds = array<i64: 1, 4, 256>}, {transform_indices = @transform_1, window_bounds = array<i64: 8, 4>}, {transform_indices = @transform_2, window_bounds = array<i64: 8, 1>}, {transform_indices = @transform_3, window_bounds = array<i64: 1, 8, 256>}]} {
    %c0_i32 = arith.constant 0 : i32
    %0 = arith.cmpi eq, %arg3, %c0_i32 : i32
    %1 = arith.extui %0 : i1 to i32
    %c0_i32_0 = arith.constant 0 : i32
    %2 = arith.cmpi ne, %1, %c0_i32_0 : i32
    scf.if %2 {
      %cst_11 = arith.constant 0.000000e+00 : f32
      %13 = vector.broadcast %cst_11 : f32 to vector<8x256xf32>
      %c0_12 = arith.constant 0 : index
      %c0_13 = arith.constant 0 : index
      %14 = vector.load %arg8[%c0_12, %c0_13] : memref<8x256xf32, #tpu.memory_space<vmem>>, vector<8x256xf32>
      tpu.vector_store %arg8[%c0_12, %c0_13], %13 {strides = array<i32>} : memref<8x256xf32, #tpu.memory_space<vmem>>, vector<8x256xf32>,
    } else {
    }
    %c0 = arith.constant 0 : index
    %c0_1 = arith.constant 0 : index
    %3 = vector.load %arg8[%c0, %c0_1] : memref<8x256xf32, #tpu.memory_space<vmem>>, vector<8x256xf32>
    %c0_2 = arith.constant 0 : index
    %c0_3 = arith.constant 0 : index
    %4 = vector.load %arg5[%c0_2, %c0_3] : memref<8x4xf32, #tpu.memory_space<vmem>>, vector<8x4xf32>
    %c0_4 = arith.constant 0 : index
    %c0_5 = arith.constant 0 : index
    %c0_6 = arith.constant 0 : index
    %5 = vector.load %arg4[%c0_4, %c0_5, %c0_6] : memref<1x4x256xf32, #tpu.memory_space<vmem>>, vector<1x4x256xf32>
    %6 = vector.shape_cast %5 : vector<1x4x256xf32> to vector<4x256xf32>
    %cst = arith.constant dense<0.000000e+00> : vector<8x256xf32>
    %7 = tpu.matmul %4, %6, %cst {dimension_numbers = #tpu.dot_dimension_numbers<[1], [0], [0], [1], [0, 0, 1, 1], [], []>} : vector<8x4xf32>, vector<4x256xf32>, vector<8x256xf32> -> vector<8x256xf32>
    %8 = arith.addf %3, %7 : vector<8x256xf32>
    %c0_7 = arith.constant 0 : index
    %c0_8 = arith.constant 0 : index
    %9 = vector.load %arg8[%c0_7, %c0_8] : memref<8x256xf32, #tpu.memory_space<vmem>>, vector<8x256xf32>
    tpu.vector_store %arg8[%c0_7, %c0_8], %8 {strides = array<i32>} : memref<8x256xf32, #tpu.memory_space<vmem>>, vector<8x256xf32>,
    %c0_i32_9 = arith.constant 0 : i32
    %10 = arith.cmpi eq, %arg3, %c0_i32_9 : i32
    %11 = arith.extui %10 : i1 to i32
    %c0_i32_10 = arith.constant 0 : i32
    %12 = arith.cmpi ne, %11, %c0_i32_10 : i32
    scf.if %12 {
      %c0_11 = arith.constant 0 : index
      %c0_12 = arith.constant 0 : index
      %13 = vector.load %arg8[%c0_11, %c0_12] : memref<8x256xf32, #tpu.memory_space<vmem>>, vector<8x256xf32>
      %c0_13 = arith.constant 0 : index
      %c0_14 = arith.constant 0 : index
      %14 = vector.load %arg6[%c0_13, %c0_14] : memref<8x1xf32, #tpu.memory_space<vmem>>, vector<8x1xf32>
      %15 = vector.broadcast %14 : vector<8x1xf32> to vector<8x256xf32>
      %16 = arith.addf %13, %15 : vector<8x256xf32>
      %17 = arith.negf %16 : vector<8x256xf32>
      %18 = math.exp %17 : vector<8x256xf32>
      %cst_15 = arith.constant 1.000000e+00 : f32
      %19 = vector.broadcast %cst_15 : f32 to vector<8x256xf32>
      %20 = arith.addf %19, %18 : vector<8x256xf32>
      %21 = arith.divf %19, %20 : vector<8x256xf32>
      %22 = arith.mulf %16, %21 : vector<8x256xf32>
      %c0_16 = arith.constant 0 : index
      %c0_17 = arith.constant 0 : index
      %c0_18 = arith.constant 0 : index
      %23 = vector.load %arg7[%c0_16, %c0_17, %c0_18] : memref<1x8x256xf32, #tpu.memory_space<vmem>>, vector<1x8x256xf32>
      %24 = vector.shape_cast %23 : vector<1x8x256xf32> to vector<8x256xf32>
      %25 = vector.shape_cast %22 : vector<8x256xf32> to vector<1x8x256xf32>
      tpu.vector_store %arg7[%c0_16, %c0_17, %c0_18], %25 {strides = array<i32>} : memref<1x8x256xf32, #tpu.memory_space<vmem>>, vector<1x8x256xf32>,
    } else {
    }
    return
  }
  func.func @transform_0(%arg0: i32, %arg1: i32, %arg2: i32, %arg3: i32) -> (i32, i32, i32) {
    %c0_i32 = arith.constant 0 : i32
    return %arg0, %arg3, %arg1 : i32, i32, i32
  }
  func.func @transform_1(%arg0: i32, %arg1: i32, %arg2: i32, %arg3: i32) -> (i32, i32) {
    %c0_i32 = arith.constant 0 : i32
    return %arg2, %arg3 : i32, i32
  }
  func.func @transform_2(%arg0: i32, %arg1: i32, %arg2: i32, %arg3: i32) -> (i32, i32) {
    %c0_i32 = arith.constant 0 : i32
    %c0_i32_0 = arith.constant 0 : i32
    return %arg2, %c0_i32 : i32, i32
  }
  func.func @transform_3(%arg0: i32, %arg1: i32, %arg2: i32, %arg3: i32) -> (i32, i32, i32) {
    %c0_i32 = arith.constant 0 : i32
    return %arg0, %arg2, %arg1 : i32, i32, i32
  }
}

</mosaic_0001>

<llo_original>
// kernel: tpu_custom_call.1
$region0: #{tpu_custom_call.1}
  #allocation0 [shape = 'u32[]', space=smem, size = 0x4, offset = 0x4, fixed_abs, tag = 'smem constant byte address 0x4 - core index']
  #allocation1 [shape = 'u32[144,128]{1,0:T(1,128)}', space=vmem, size = 0x12000, scoped, tag = 'internal scratch']
  #allocation2 [shape = 'f32[8,256]{1,0:T(8,128)}', space=vmem, size = 0x2000, scoped, tag = 'scratch operand']
  %s0 = inlined_call_operand.vmem [shape: f32[2,4,256], index: 0, kind: input, shape index: {}]
  %s1 = inlined_call_operand.vmem [shape: f32[8,4], index: 1, kind: input, shape index: {}]
  %s2 = inlined_call_operand.vmem [shape: f32[8,1], index: 2, kind: input, shape index: {}]
  %s3 = inlined_call_operand.hbm [shape: f32[2,8,256], index: 3, kind: output, shape index: {}]
  %s4 = sld [smem:[#allocation0]]
  $region53: #{tpu_custom_call.1} parent=0
    _
  %s6 = ssub.s32 1, %s4
  %s7 = scalar_select 0, %s6, %s4
  $region1: #{tpu_custom_call.1} parent=0
    #allocation3 [shape = 'u8[16384]{0}', space=vmem, size = 0x4000, scoped, tag = 'output window, operand 0']
    #allocation4 [shape = 's32[2]{0}', space=sflag, size = 0x8, scoped, tag = 'scoped memory for tpu_custom_call.1']
    %8 = vsyncpa [#allocation4], 0
    %s9 = scalar_lea.sflag [#allocation4], 1
    %10 = vsyncpa %s9, 0
    loop: start=0, step=1, limit=4
    $region2: #{tpu_custom_call.1} parent=1 // loop_pre_header
      _
    $region3: #{tpu_custom_call.1} parent=1 // loop_header
      %s12 = sphi 0, %s16
      %p13 = scmp.ge.s32.totalorder %s12, 4
      %s19 = sphi 0, %s45
      %s20 = sphi 0, %s41
      %s21 = sphi 0, %s37
      %s22 = sphi 0, %s33
      %s23 = sphi 0, %s19
      %s24 = sphi 0, %s20
      %s25 = sphi 0, %s21
      %s26 = sphi 0, %s22
      %s27 = sphi 0, %s23
      %s28 = sphi 0, %s24
      %s29 = sphi 0, %s25
      %s30 = sphi 0, %s26
      %s52 = sphi 0, %s54
      %s55 = sphi 0, %s52
      %s56 = sphi 0, %s55
      %s72 = sphi 0, %s56
      %s80 = sphi 0, %s82
      %s83 = sphi 0, %s80
      %s84 = sphi 0, %s83
      %s100 = sphi 0, %s84
      %s106 = sphi 0, %s108
      %s109 = sphi 0, %s106
      %s110 = sphi 0, %s109
      %s126 = sphi 0, %s110
      %s136 = sphi 0, %s138
      %s139 = sphi 0, %s136
      %s140 = sphi 0, %s139
      %s156 = sphi 0, %s140
    $region4: #{tpu_custom_call.1} parent=1 // loop_header_branch
      %15 = sbr.rel (%p13) target = $region8
    $region5: #{tpu_custom_call.1} parent=1 // loop_body
      %s17 = ssub.s32 %s12, 1
      %s18 = ssub.s32 %s12, 2
      %s31 = sadd.s32 1, %s22
      %p32 = scmp.ge.s32.totalorder %s31, 1
      %s33 = scalar_select %p32, 0, %s31
      %s34 = sadd.s32 1, %s21
      %s35 = scalar_select %p32, %s34, %s21
      %p36 = scmp.ge.s32.totalorder %s35, 1
      %s37 = scalar_select %p36, 0, %s35
      %s38 = sadd.s32 1, %s20
      %s39 = scalar_select %p36, %s38, %s20
      %p40 = scmp.ge.s32.totalorder %s39, 1
      %s41 = scalar_select %p40, 0, %s39
      %s42 = sadd.s32 1, %s19
      %s43 = scalar_select %p40, %s42, %s19
      %p44 = scmp.ge.s32.totalorder %s43, 2
      %s45 = scalar_select %p44, 0, %s43
      %s46 = ssub.s32 %s19, %s45
      %s47 = ssub.s32 %s22, %s33
      %s48 = sor.u32 %s46, %s47
      %s49 = ssub.s32 %s20, %s41
      %s50 = sor.u32 %s48, %s49
      %p51 = scmp.eq.s32.totalorder %s50, 0
      %s53 = sadd.s32 %s52, 1
      %s54 = scalar_select %p51, %s52, %s53
      %p57 = pneg %p51
      %p58 = scmp.eq.s32.totalorder %s12, 1
      %p59 = por %p57, %p58
      %p60 = scmp.ne.s32.totalorder %s52, %s55
      %p61 = scmp.eq.s32.totalorder %s12, 0
      %p62 = por %p60, %p61
      %p63 = scmp.ne.s32.totalorder %s52, %s55
      %p64 = scmp.eq.s32.totalorder %s17, 1
      %p65 = por %p63, %p64
      %p66 = scmp.ne.s32.totalorder %s55, %s56
      %p67 = scmp.eq.s32.totalorder %s17, 0
      %p68 = por %p66, %p67
      %p69 = scmp.ne.s32.totalorder %s55, %s56
      %p70 = scmp.eq.s32.totalorder %s18, 1
      %p71 = por %p69, %p70
      %p73 = scmp.ne.s32.totalorder %s56, %s72
      %p74 = scmp.eq.s32.totalorder %s18, 0
      %p75 = por %p73, %p74
      %s76 = ssub.s32 %s21, %s37
      %s77 = ssub.s32 %s22, %s33
      %s78 = sor.u32 %s76, %s77
      %p79 = scmp.eq.s32.totalorder %s78, 0
      %s81 = sadd.s32 %s80, 1
      %s82 = scalar_select %p79, %s80, %s81
      %p85 = pneg %p79
      %p86 = scmp.eq.s32.totalorder %s12, 1
      %p87 = por %p85, %p86
      %p88 = scmp.ne.s32.totalorder %s80, %s83
      %p89 = scmp.eq.s32.totalorder %s12, 0
      %p90 = por %p88, %p89
      %p91 = scmp.ne.s32.totalorder %s80, %s83
      %p92 = scmp.eq.s32.totalorder %s17, 1
      %p93 = por %p91, %p92
      %p94 = scmp.ne.s32.totalorder %s83, %s84
      %p95 = scmp.eq.s32.totalorder %s17, 0
      %p96 = por %p94, %p95
      %p97 = scmp.ne.s32.totalorder %s83, %s84
      %p98 = scmp.eq.s32.totalorder %s18, 1
      %p99 = por %p97, %p98
      %p101 = scmp.ne.s32.totalorder %s84, %s100
      %p102 = scmp.eq.s32.totalorder %s18, 0
      %p103 = por %p101, %p102
      %s104 = ssub.s32 %s21, %s37
      %p105 = scmp.eq.s32.totalorder %s104, 0
      %s107 = sadd.s32 %s106, 1
      %s108 = scalar_select %p105, %s106, %s107
      %p111 = pneg %p105
      %p112 = scmp.eq.s32.totalorder %s12, 1
      %p113 = por %p111, %p112
      %p114 = scmp.ne.s32.totalorder %s106, %s109
      %p115 = scmp.eq.s32.totalorder %s12, 0
      %p116 = por %p114, %p115
      %p117 = scmp.ne.s32.totalorder %s106, %s109
      %p118 = scmp.eq.s32.totalorder %s17, 1
      %p119 = por %p117, %p118
      %p120 = scmp.ne.s32.totalorder %s109, %s110
      %p121 = scmp.eq.s32.totalorder %s17, 0
      %p122 = por %p120, %p121
      %p123 = scmp.ne.s32.totalorder %s109, %s110
      %p124 = scmp.eq.s32.totalorder %s18, 1
      %p125 = por %p123, %p124
      %p127 = scmp.ne.s32.totalorder %s110, %s126
      %p128 = scmp.eq.s32.totalorder %s18, 0
      %p129 = por %p127, %p128
      %s130 = ssub.s32 %s19, %s45
      %s131 = ssub.s32 %s21, %s37
      %s132 = sor.u32 %s130, %s131
      %s133 = ssub.s32 %s20, %s41
      %s134 = sor.u32 %s132, %s133
      %p135 = scmp.eq.s32.totalorder %s134, 0
      %s137 = sadd.s32 %s136, 1
      %s138 = scalar_select %p135, %s136, %s137
      %p141 = pneg %p135
      %p142 = scmp.eq.s32.totalorder %s12, 1
      %p143 = por %p141, %p142
      %p144 = scmp.ne.s32.totalorder %s136, %s139
      %p145 = scmp.eq.s32.totalorder %s12, 0
      %p146 = por %p144, %p145
      %p147 = scmp.ne.s32.totalorder %s136, %s139
      %p148 = scmp.eq.s32.totalorder %s17, 1
      %p149 = por %p147, %p148
      %p150 = scmp.ne.s32.totalorder %s139, %s140
      %p151 = scmp.eq.s32.totalorder %s17, 0
      %p152 = por %p150, %p151
      %p153 = scmp.ne.s32.totalorder %s139, %s140
      %p154 = scmp.eq.s32.totalorder %s18, 1
      %p155 = por %p153, %p154
      %p157 = scmp.ne.s32.totalorder %s140, %s156
      %p158 = scmp.eq.s32.totalorder %s18, 0
      %p159 = por %p157, %p158
      %p160 = scmp.le.s32.totalorder 1, %s12
      %p161 = scmp.lt.s32.totalorder %s12, 3
      %p162 = pnand %p160, %p161
      %p163 = pneg %p162
      // Predicated region
      $region9: #{tpu_custom_call.1} parent=5 // pred_check
        _
      $region10: #{tpu_custom_call.1} parent=5 // pred_check_branch
        %165 = sbr.rel (%p162) target = $region12
      $region11: #{tpu_custom_call.1} parent=5 // pred_region
        %s166 = ssub.s32 %s12, 1
        // Predicated region
        $region13: #{tpu_custom_call.1} parent=11 // pred_check
          %p167 = pneg %p96
        $region14: #{tpu_custom_call.1} parent=11 // pred_check_branch
          %169 = sbr.rel (%p167) target = $region16
        $region15: #{tpu_custom_call.1} parent=11 // pred_region
          %p170 = scmp.lt.s32.totalorder %s25, 0
          %s171 = scalar_select %p170, %s25, 0
          %p172 = scmp.lt.s32.totalorder %s26, 0
          %s173 = scalar_select %p172, %s26, 0
          %s174 = sadd.s32 %s173, %s171
          %s175 = smul.addr %s174, 8
          %s176 = scalar_lea.vmem %s1, %s175
        $region16: #{tpu_custom_call.1} parent=11 // pred_fallthru
          _
        // Predicated region
        $region17: #{tpu_custom_call.1} parent=11 // pred_check
          %p177 = pneg %p122
        $region18: #{tpu_custom_call.1} parent=11 // pred_check_branch
          %179 = sbr.rel (%p177) target = $region20
        $region19: #{tpu_custom_call.1} parent=11 // pred_region
          %p180 = scmp.lt.s32.totalorder %s25, 0
          %s181 = scalar_select %p180, %s25, 0
          %s182 = smul.addr %s181, 8
          %s183 = scalar_lea.vmem %s2, %s182
        $region20: #{tpu_custom_call.1} parent=11 // pred_fallthru
          _
      $region12: #{tpu_custom_call.1} parent=5 // pred_fallthru
        _
      %p184 = scmp.lt.s32.totalorder %s12, 2
      // Predicated region
      $region21: #{tpu_custom_call.1} parent=5 // pred_check
        %p185 = pneg %p184
      $region22: #{tpu_custom_call.1} parent=5 // pred_check_branch
        %187 = sbr.rel (%p185) target = $region24
      $region23: #{tpu_custom_call.1} parent=5 // pred_region
        // Predicated region
        $region25: #{tpu_custom_call.1} parent=23 // pred_check
          %p188 = pneg %p62
        $region26: #{tpu_custom_call.1} parent=23 // pred_check_branch
          %190 = sbr.rel (%p188) target = $region28
        $region27: #{tpu_custom_call.1} parent=23 // pred_region
          %s191 = smul.u32 2, %s20
          %p192 = scmp.lt.s32.totalorder %s19, 1
          %s193 = scalar_select %p192, %s19, 1
          %p194 = scmp.lt.s32.totalorder %s22, 0
          %s195 = scalar_select %p194, %s22, 0
          %p196 = scmp.lt.s32.totalorder %s191, 1
          %s197 = scalar_select %p196, %s191, 1
          %s198 = smul.addr %s195, 2
          %s199 = sadd.s32 %s197, %s198
          %s200 = smul.addr %s193, 2
          %s201 = sadd.s32 %s199, %s200
          %s202 = smul.addr %s201, 4
          %s203 = scalar_lea.vmem %s0, %s202
          %s204 = smul.u32 2, %s20
        $region28: #{tpu_custom_call.1} parent=23 // pred_fallthru
          _
      $region24: #{tpu_custom_call.1} parent=5 // pred_fallthru
        _
      %p205 = scmp.le.s32.totalorder 1, %s12
      %p206 = scmp.lt.s32.totalorder %s12, 3
      %p207 = pnand %p205, %p206
      %p208 = pneg %p207
      // Predicated region
      $region29: #{tpu_custom_call.1} parent=5 // pred_check
        _
      $region30: #{tpu_custom_call.1} parent=5 // pred_check_branch
        %210 = sbr.rel (%p207) target = $region32
      $region31: #{tpu_custom_call.1} parent=5 // pred_region
        %s211 = ssub.s32 %s12, 1
        %s212 = smul.u32 2, %s24
        %p213 = scmp.lt.s32.totalorder %s23, 1
        %s214 = scalar_select %p213, %s23, 1
        %p215 = scmp.lt.s32.totalorder %s26, 0
        %s216 = scalar_select %p215, %s26, 0
        %p217 = scmp.lt.s32.totalorder %s212, 1
        %s218 = scalar_select %p217, %s212, 1
        %s219 = smul.addr %s216, 2
        %s220 = sadd.s32 %s218, %s219
        %s221 = smul.addr %s214, 2
        %s222 = sadd.s32 %s220, %s221
        %s223 = smul.addr %s222, 4
        %s224 = scalar_lea.vmem %s0, %s223
        %p225 = pneg %p68
        %p226 = pneg %p65
        %p227 = scmp.lt.s32.totalorder %s25, 0
        %s228 = scalar_select %p227, %s25, 0
        %p229 = scmp.lt.s32.totalorder %s26, 0
        %s230 = scalar_select %p229, %s26, 0
        %s231 = sadd.s32 %s230, %s228
        %s232 = smul.addr %s231, 8
        %s233 = scalar_lea.vmem %s1, %s232
        %p234 = pneg %p96
        %p235 = pneg %p93
        %p236 = scmp.lt.s32.totalorder %s25, 0
        %s237 = scalar_select %p236, %s25, 0
        %s238 = smul.addr %s237, 8
        %s239 = scalar_lea.vmem %s2, %s238
        %p240 = pneg %p122
        %p241 = pneg %p119
        %p242 = pneg %p152
        %p243 = pneg %p149
        %s244 = sand.u32 %s139, 1
        %s245 = scalar_lea.sflag [#allocation4], %s244
        %s246 = sand.u32 %s139, 1
        %s247 = smul.addr %s246, 16
        %s248 = scalar_lea.vmem [#allocation3], %s247
        %s249 = smul.u32 2, %s24
        %p250 = scmp.lt.s32.totalorder %s23, 1
        %s251 = scalar_select %p250, %s23, 1
        %p252 = scmp.lt.s32.totalorder %s26, 0
        %s253 = scalar_select %p252, %s26, 0
        %p254 = scmp.lt.s32.totalorder %s249, 1
        %s255 = scalar_select %p254, %s249, 1
        %s256 = smul.addr %s253, 2
        %s257 = sadd.s32 %s255, %s256
        %s258 = smul.addr %s251, 2
        %s259 = sadd.s32 %s257, %s258
        %s260 = smul.addr %s259, 4
        %s261 = scalar_lea.vmem %s0, %s260
        %s262 = smul.u32 2, %s24
        %p263 = scmp.lt.s32.totalorder %s25, 0
        %s264 = scalar_select %p263, %s25, 0
        %p265 = scmp.lt.s32.totalorder %s26, 0
        %s266 = scalar_select %p265, %s26, 0
        %s267 = sadd.s32 %s266, %s264
        %s268 = smul.addr %s267, 8
        %s269 = scalar_lea.vmem %s1, %s268
        %p270 = scmp.lt.s32.totalorder %s25, 0
        %s271 = scalar_select %p270, %s25, 0
        %s272 = smul.addr %s271, 8
        %s273 = scalar_lea.vmem %s2, %s272
        %s274 = smul.u32 2, %s24
        %p275 = scmp.eq.s32.totalorder %s26, 0
        // Predicated region
        $region33: #{tpu_custom_call.1} parent=31 // pred_check
          %p276 = pneg %p275
        $region34: #{tpu_custom_call.1} parent=31 // pred_check_branch
          %278 = sbr.rel (%p276) target = $region36
        $region35: #{tpu_custom_call.1} parent=31 // pred_region
          %279 = vst [vmem:[#allocation2] sm:$0xff] 0.0
          %280 = vst [vmem:[#allocation2 + $0x8] sm:$0xff] 0.0
        $region36: #{tpu_custom_call.1} parent=31 // pred_fallthru
          _
        %v281 = vld [vmem:[#allocation2] sm:$0xff]
        %v282 = vld [vmem:[#allocation2 + $0x8] sm:$0xff]
        %v283 = vld [vmem:[%s269] sm:$0xff]
        %v284 = vld [vmem:[%s261] sm:$0xff]
        %v286 = vcombine.high %v284, %v284
        %vm287 = vcmask 31744
        %v289 = vsel %vm287, %v283, 0
        %vm291 = vcmask 1043456
        %v292 = vsel %vm291, %v284, 0
        %v294 = vsel %vm291, %v286, 0
        %296 = vmatprep.subr.mxu0 %v294
        %297 = vmatpush1.msra.mxu0 %v292
        %298 = vmatprep.subr.mxu0 0.0
        %299 = vmatpush1.msra.mxu0 0.0
        %300 = vmatprep.subr.mxu0 0.0
        %301 = vmatpush1.msra.mxu0 0.0
        %302 = vmatprep.subr.mxu0 0.0
        %303 = vmatpush1.msra.mxu0 0.0
        %304 = vmatprep.subr.mxu0 0.0
        %305 = vmatpush1.msra.mxu0 0.0
        %306 = vmatprep.subr.mxu0 0.0
        %307 = vmatpush1.msra.mxu0 0.0
        %308 = vmatprep.subr.mxu0 0.0
        %309 = vmatpush1.msra.mxu0 0.0
        %310 = vmatprep.subr.mxu0 0.0
        %311 = vmatpush1.msra.mxu0 0.0
        %312 = vmatprep.subr.mxu0 0.0
        %313 = vmatpush1.msra.mxu0 0.0
        %314 = vmatprep.subr.mxu0 0.0
        %315 = vmatpush1.msra.mxu0 0.0
        %316 = vmatprep.subr.mxu0 0.0
        %317 = vmatpush1.msra.mxu0 0.0
        %318 = vmatprep.subr.mxu0 0.0
        %319 = vmatpush1.msra.mxu0 0.0
        %320 = vmatprep.subr.mxu0 0.0
        %321 = vmatpush1.msra.mxu0 0.0
        %322 = vmatprep.subr.mxu0 0.0
        %323 = vmatpush1.msra.mxu0 0.0
        %324 = vmatprep.subr.mxu0 0.0
        %325 = vmatpush1.msra.mxu0 0.0
        %326 = vmatprep.subr.mxu0 0.0
        %327 = vmatpush1.msra.mxu0 0.0
        %328 = vmatprep.subr.mxu0 0.0
        %329 = vmatpush1.msra.mxu0 0.0
        %330 = vmatprep.subr.mxu0 0.0
        %331 = vmatpush1.msra.mxu0 0.0
        %332 = vmatprep.subr.mxu0 0.0
        %333 = vmatpush1.msra.mxu0 0.0
        %334 = vmatprep.subr.mxu0 0.0
        %335 = vmatpush1.msra.mxu0 0.0
        %336 = vmatprep.subr.mxu0 0.0
        %337 = vmatpush1.msra.mxu0 0.0
        %338 = vmatprep.subr.mxu0 0.0
        %339 = vmatpush1.msra.mxu0 0.0
        %340 = vmatprep.subr.mxu0 0.0
        %341 = vmatpush1.msra.mxu0 0.0
        %342 = vmatprep.subr.mxu0 0.0
        %343 = vmatpush1.msra.mxu0 0.0
        %344 = vmatprep.subr.mxu0 0.0
        %345 = vmatpush1.msra.mxu0 0.0
        %346 = vmatprep.subr.mxu0 0.0
        %347 = vmatpush1.msra.mxu0 0.0
        %348 = vmatprep.subr.mxu0 0.0
        %349 = vmatpush1.msra.mxu0 0.0
        %350 = vmatprep.subr.mxu0 0.0
        %351 = vmatpush1.msra.mxu0 0.0
        %352 = vmatprep.subr.mxu0 0.0
        %353 = vmatpush1.msra.mxu0 0.0
        %354 = vmatprep.subr.mxu0 0.0
        %355 = vmatpush1.msra.mxu0 0.0
        %356 = vmatprep.subr.mxu0 0.0
        %357 = vmatpush1.msra.mxu0 0.0
        %358 = vmatprep.subr.mxu0 0.0
        %359 = vmatpush1.msra.mxu0 0.0
        %360 = vmatprep.mubr.f32.mxu0 0.0
        %361 = vmatmul.mubr.f32.gmra.mrb[0].mxu0 %v289
        %v362 = vpop.f32.mrb[0].mxu0
        %v363 = vadd.f32 0.0, %v362
        %v364 = vpop.f32.mrb[0].mxu0
        %v365 = vadd.f32 0.0, %v364
        %366 = vdwg.mxu0
        %v367 = vadd.f32 %v281, %v363
        %v368 = vadd.f32 %v282, %v365
        %369 = vst [vmem:[#allocation2] sm:$0xff] %v367
        %370 = vst [vmem:[#allocation2 + $0x8] sm:$0xff] %v368
        // Predicated region
        $region37: #{tpu_custom_call.1} parent=31 // pred_check
          %p371 = pneg %p275
        $region38: #{tpu_custom_call.1} parent=31 // pred_check_branch
          %373 = sbr.rel (%p371) target = $region40
        $region39: #{tpu_custom_call.1} parent=31 // pred_region
          %v374 = vld [vmem:[#allocation2] sm:$0xff]
          %v375 = vld [vmem:[#allocation2 + $0x8] sm:$0xff]
          %v376 = vld [vmem:[%s273] sm:$0xff]
          %378 = vset.pattern.permute.xlu0 0
          %379 = vperm.xlu0 %378, %v376
          %v380 = vpop.permute.xlu0 %379
          %v382 = vadd.f32 %v374, %v380
          %v383 = vadd.f32 %v375, %v380
          %v384 = vxor.u32 %v382, 2147483648
          %v385 = vxor.u32 %v383, 2147483648
          %v386 = vmul.f32 %v384, 1.442695
          %v387 = vpow.pop %v386
          %v388 = vmul.f32 %v385, 1.442695
          %v389 = vpow.pop %v388
          %v390 = vadd.f32 %v387, 1.0
          %v391 = vadd.f32 %v389, 1.0
          %v392 = vrcp.pop %v390
          %v393 = vmul.f32 1.0, %v392
          %v394 = vrcp.pop %v391
          %v395 = vmul.f32 1.0, %v394
          %v396 = vmul.f32 %v382, %v393
          %v397 = vmul.f32 %v383, %v395
          %398 = vst [vmem:[%s248] sm:$0xff] %v396
          %399 = vst [vmem:[%s248 + $0x8] sm:$0xff] %v397
        $region40: #{tpu_custom_call.1} parent=31 // pred_fallthru
          _
        %s400 = sand.u32 %s139, 1
        %s401 = scalar_lea.sflag [#allocation4], %s400
        %s402 = sand.u32 %s139, 1
        %s403 = smul.addr %s402, 16
        %s404 = scalar_lea.vmem [#allocation3], %s403
        // Predicated region
        $region41: #{tpu_custom_call.1} parent=31 // pred_check
          %p405 = pneg %p149
        $region42: #{tpu_custom_call.1} parent=31 // pred_check_branch
          %407 = sbr.rel (%p405) target = $region44
        $region43: #{tpu_custom_call.1} parent=31 // pred_region
          %s408 = smul.u32 2, %s24
          %s410 = ssub.s32 256, 256
          %411 = vsyncadd %s401, %s410
          %s412 = smul.addr %s25, 2
          %s413 = sadd.s32 %s408, %s412
          %s414 = smul.addr %s23, 2
          %s415 = sadd.s32 %s413, %s414
          %s416 = smul.addr %s415, 128
          %s417 = scalar_lea.hbm %s3, %s416
          %s419 = sshll.u32 %s404, 4
          %s420 = int_to_ptr.vmem [resolvable:$true] %s419
          %422 = dma.vmem_to_hbm [thread:$0]  %s420, 256, %s417, %s401
        $region44: #{tpu_custom_call.1} parent=31 // pred_fallthru
          _
      $region32: #{tpu_custom_call.1} parent=5 // pred_fallthru
        _
      %p423 = scmp.le.s32.totalorder 2, %s12
      // Predicated region
      $region45: #{tpu_custom_call.1} parent=5 // pred_check
        %p424 = pneg %p423
      $region46: #{tpu_custom_call.1} parent=5 // pred_check_branch
        %426 = sbr.rel (%p424) target = $region48
      $region47: #{tpu_custom_call.1} parent=5 // pred_region
        %s427 = ssub.s32 %s12, 2
        // Predicated region
        $region49: #{tpu_custom_call.1} parent=47 // pred_check
          %p428 = pneg %p155
        $region50: #{tpu_custom_call.1} parent=47 // pred_check_branch
          %430 = sbr.rel (%p428) target = $region52
        $region51: #{tpu_custom_call.1} parent=47 // pred_region
          %s431 = sand.u32 %s140, 1
          %s432 = scalar_lea.sflag [#allocation4], %s431
          %s433 = sand.u32 %s140, 1
          %s434 = smul.addr %s433, 16
          %s435 = scalar_lea.vmem [#allocation3], %s434
          %436 = dma.done %s432, 256
        $region52: #{tpu_custom_call.1} parent=47 // pred_fallthru
          _
      $region48: #{tpu_custom_call.1} parent=5 // pred_fallthru
        _
    $region6: #{tpu_custom_call.1} parent=1 // loop_footer
      %s16 = sadd.s32 1, %s12
    $region7: #{tpu_custom_call.1} parent=1 // loop_footer_branch
      %11 = sbr.rel target = $region3
    $region8: #{tpu_custom_call.1} parent=1 // loop_exit
      _
    %437 = vsyncpa [#allocation4], 1
    %s438 = scalar_lea.sflag [#allocation4], 1
    %439 = vsyncpa %s438, 1

</llo_original>
